<compile_context>
chip_gen: v7x
topology: tpu7x:2x2x1
jax: 0.10.0
libtpu: 0.0.40
codegen_flags: <defaults>
</compile_context>

<pallas_src>
import jax
import jax.numpy as jnp
from jax.experimental import pallas as pl
from jax.experimental.pallas import tpu as pltpu


# ----------------------------- helpers --------------------------------------

def _round_up(x, m):
    return ((x + m - 1) // m) * m


def _cdiv(a, b):
    return -(-a // b)


def _pick_k_tile(k_dim, max_tk):
    """Largest multiple-of-128 divisor of K that is <= max_tk; else full K."""
    if k_dim <= max_tk:
        return k_dim
    tk = (max_tk // 128) * 128
    while tk >= 128:
        if k_dim % tk == 0:
            return tk
        tk -= 128
    # TODO(synk): for large K not divisible by any multiple of 128, pad K in the
    # cached weight layout (and accept a padded x read) instead of keeping the
    # full contraction resident in VMEM.
    return k_dim


# ----------------------- one-time parameter preparation ----------------------

def prepare_linear_params(weight, bias, *, compute_dtype=None):
    """One-time layout prep for nn.Linear params (call at model-init time).

    weight: (N, K) in PyTorch nn.Linear convention; bias: (N,)
    Returns:
      w_prepared: (K, n_pad) in `compute_dtype`, N padded to a multiple of 128
                  so the MXU consumes it directly and output stores are
                  lane-dense.
      b_prepared: (1, n_pad) float32 (bias add stays on the f32 accumulator).
    """
    n_out, k_in = weight.shape
    assert bias.shape == (n_out,)
    compute_dtype = compute_dtype or weight.dtype

    n_pad = max(128, _round_up(n_out, 128))
    w_t = jnp.asarray(weight).T.astype(compute_dtype)          # (K, N)
    b = jnp.asarray(bias).astype(jnp.float32)
    if n_pad != n_out:
        w_t = jnp.pad(w_t, ((0, 0), (0, n_pad - n_out)))
        b = jnp.pad(b, (0, n_pad - n_out))
    return w_t, b.reshape(1, n_pad)


# ------------------------------- kernel --------------------------------------

def _linear_kernel(x_ref, w_ref, b_ref, o_ref, acc_ref):
    # x_ref: (tm, tk); w_ref: (tk, tn); b_ref: (1, tn) f32;
    # o_ref: (tm, tn); acc_ref: (tm, tn) f32 scratch.
    k = pl.program_id(2)

    @pl.when(k == 0)
    def _():
        acc_ref[...] = jnp.zeros_like(acc_ref)

    acc_ref[...] += jnp.dot(
        x_ref[...], w_ref[...], preferred_element_type=jnp.float32
    )

    @pl.when(k == pl.num_programs(2) - 1)
    def _():
        o_ref[...] = (acc_ref[...] + b_ref[...]).astype(o_ref.dtype)


# ------------------------------- wrapper --------------------------------------

def linear_forward(x, w_prepared, b_prepared, out_features, *,
                   tile_m=512, tile_n=1024, tile_k=2048, out_dtype=None):
    """y = x @ W^T + b, using params from prepare_linear_params()."""
    orig_shape = x.shape
    k_in = orig_shape[-1]
    x2 = x.reshape(-1, k_in)
    m = x2.shape[0]
    k_w, n_pad = w_prepared.shape
    assert k_in == k_w, "weight inner dim must match x"
    out_dtype = out_dtype or x.dtype

    # Match operand dtype to the cached weight (e.g. bf16 compute path).
    if x2.dtype != w_prepared.dtype:
        x2 = x2.astype(w_prepared.dtype)

    # --- tile selection (no padding of x over M) ----------------------------
    num_m = _cdiv(m, tile_m)
    tm = _round_up(_cdiv(m, num_m), 8)                       # balanced M tiles
    tn = max(128, (min(tile_n, n_pad) // 128) * 128)         # lane-dense N tile
    tk = _pick_k_tile(k_in, tile_k)

    grid = (_cdiv(m, tm), _cdiv(n_pad, tn), _cdiv(k_in, tk))
    num_i, num_j, num_k = grid

    # --- BlockSpecs: single-buffer W / bias when their block is invariant ----
    w_map = lambda i, j, k: (k, j)
    b_map = lambda i, j, k: (0, j)
    if num_j == 1 and num_k == 1:
        w_spec = pl.BlockSpec((tk, tn), w_map, pipeline_mode=pl.Buffered(1))
        w_bufs = 1
    else:
        w_spec = pl.BlockSpec((tk, tn), w_map)
        w_bufs = 2
    if num_j == 1:
        b_spec = pl.BlockSpec((1, tn), b_map, pipeline_mode=pl.Buffered(1))
        b_bufs = 1
    else:
        b_spec = pl.BlockSpec((1, tn), b_map)
        b_bufs = 2

    # --- explicit VMEM budget -------------------------------------------------
    it_x = jnp.dtype(x2.dtype).itemsize
    it_w = jnp.dtype(w_prepared.dtype).itemsize
    it_o = jnp.dtype(out_dtype).itemsize
    vmem_needed = (
        2 * tm * tk * it_x          # x tiles (double-buffered)
        + w_bufs * tk * tn * it_w   # weight tile(s)
        + b_bufs * 8 * tn * 4       # bias tile(s), sublane-padded
        + 2 * tm * tn * it_o        # output tiles
        + tm * tn * 4               # f32 accumulator scratch
    )
    vmem_limit = min(64 * 1024 * 1024,
                     max(16 * 1024 * 1024, int(vmem_needed * 1.5)))

    cost = pl.CostEstimate(
        flops=2 * m * n_pad * k_in,
        transcendentals=0,
        bytes_accessed=(m * k_in * it_x + k_in * n_pad * it_w
                        + n_pad * 4 + m * n_pad * it_o),
    )

    y_full = pl.pallas_call(
        _linear_kernel,
        out_shape=jax.ShapeDtypeStruct((m, n_pad), out_dtype),
        grid_spec=pltpu.PrefetchScalarGridSpec(
            num_scalar_prefetch=0,
            grid=grid,
            in_specs=[
                pl.BlockSpec((tm, tk), lambda i, j, k: (i, k)),   # x streams
                w_spec,                                           # weight
                b_spec,                                           # bias
            ],
            out_specs=pl.BlockSpec((tm, tn), lambda i, j, k: (i, j)),
            scratch_shapes=[pltpu.VMEM((tm, tn), jnp.float32)],
        ),
        compiler_params=pltpu.CompilerParams(
            dimension_semantics=("parallel", "parallel", "arbitrary"),
            vmem_limit_bytes=vmem_limit,
        ),
        cost_estimate=cost,
    )(x2, w_prepared, b_prepared)

    y = y_full[:, :out_features] if n_pad != out_features else y_full
    return y.reshape(*orig_shape[:-1], out_features)


class LinearRegressionModel:
    """JAX/Pallas port of the PyTorch LinearRegressionModel (single nn.Linear).

    Layout prep (transpose + pad + optional bf16 cast) happens once here, not
    per forward call.
    """

    def __init__(self, weight, bias, *, compute_dtype=None):
        self.out_features = weight.shape[0]
        self.w_prepared, self.b_prepared = prepare_linear_params(
            weight, bias, compute_dtype=compute_dtype
        )

    def __call__(self, x, **kwargs):
        return linear_forward(
            x, self.w_prepared, self.b_prepared, self.out_features, **kwargs
        )


# -------------------------------- demo ----------------------------------------

if __name__ == "__main__":
    batch, input_dim, output_dim = 8, 32, 8

    key = jax.random.PRNGKey(0)
    kx, kw, kb = jax.random.split(key, 3)

    x = jax.random.normal(kx, (batch, input_dim), dtype=jnp.float32)
    # Mimic nn.Linear's uniform(-1/sqrt(K), 1/sqrt(K)) init.
    bound = 1.0 / jnp.sqrt(jnp.float32(input_dim))
    weight = jax.random.uniform(
        kw, (output_dim, input_dim), dtype=jnp.float32, minval=-bound, maxval=bound
    )
    bias = jax.random.uniform(
        kb, (output_dim,), dtype=jnp.float32, minval=-bound, maxval=bound
    )

    model = LinearRegressionModel(weight, bias)   # one-time layout prep
    y = model(x)
    jax.block_until_ready(y)

    # Reference check against plain JAX (exact nn.Linear semantics).
    y_ref = x @ weight.T + bias
    assert y.shape == y_ref.shape, "shape mismatch vs reference"
    assert jnp.allclose(y, y_ref, atol=1e-5, rtol=1e-5), "mismatch vs reference"

    print("KERNEL_OK")
</pallas_src>

<mosaic_0001>
module attributes {stable_mosaic.version = 11 : i64} {
  func.func @_linear_kernel(%arg0: i32, %arg1: i32, %arg2: i32, %arg3: memref<8x32xf32, #tpu.memory_space<vmem>>, %arg4: memref<32x128xf32, #tpu.memory_space<vmem>>, %arg5: memref<1x128xf32, #tpu.memory_space<vmem>>, %arg6: memref<8x128xf32, #tpu.memory_space<vmem>>, %arg7: memref<8x128xf32, #tpu.memory_space<vmem>>) attributes {dimension_semantics = [#tpu.dimension_semantics<parallel>, #tpu.dimension_semantics<parallel>, #tpu.dimension_semantics<arbitrary>], iteration_bounds = array<i64: 1, 1, 1>, scalar_prefetch = 0 : i64, scratch_operands = 1 : i64, tpu.core_type = #tpu.core_type<tc>, window_params = [{transform_indices = @transform_0, window_bounds = array<i64: 8, 32>}, {pipeline_mode = #tpu.pipeline_mode<synchronous>, transform_indices = @transform_1, window_bounds = array<i64: 32, 128>}, {pipeline_mode = #tpu.pipeline_mode<synchronous>, transform_indices = @transform_2, window_bounds = array<i64: 1, 128>}, {transform_indices = @transform_3, window_bounds = array<i64: 8, 128>}]} {
    %c0_i32 = arith.constant 0 : i32
    %0 = arith.cmpi eq, %arg2, %c0_i32 : i32
    %1 = arith.extui %0 : i1 to i32
    %c0_i32_0 = arith.constant 0 : i32
    %2 = arith.cmpi ne, %1, %c0_i32_0 : i32
    scf.if %2 {
      %cst_10 = arith.constant 0.000000e+00 : f32
      %12 = vector.broadcast %cst_10 : f32 to vector<8x128xf32>
      %c0_11 = arith.constant 0 : index
      %c0_12 = arith.constant 0 : index
      %13 = vector.load %arg7[%c0_11, %c0_12] : memref<8x128xf32, #tpu.memory_space<vmem>>, vector<8x128xf32>
      tpu.vector_store %arg7[%c0_11, %c0_12], %12 {strides = array<i32>} : memref<8x128xf32, #tpu.memory_space<vmem>>, vector<8x128xf32>,
    } else {
    }
    %c0 = arith.constant 0 : index
    %c0_1 = arith.constant 0 : index
    %3 = vector.load %arg7[%c0, %c0_1] : memref<8x128xf32, #tpu.memory_space<vmem>>, vector<8x128xf32>
    %c0_2 = arith.constant 0 : index
    %c0_3 = arith.constant 0 : index
    %4 = vector.load %arg3[%c0_2, %c0_3] : memref<8x32xf32, #tpu.memory_space<vmem>>, vector<8x32xf32>
    %c0_4 = arith.constant 0 : index
    %c0_5 = arith.constant 0 : index
    %5 = vector.load %arg4[%c0_4, %c0_5] : memref<32x128xf32, #tpu.memory_space<vmem>>, vector<32x128xf32>
    %cst = arith.constant dense<0.000000e+00> : vector<8x128xf32>
    %6 = tpu.matmul %4, %5, %cst {dimension_numbers = #tpu.dot_dimension_numbers<[1], [0], [0], [1], [0, 0, 1, 1], [], []>} : vector<8x32xf32>, vector<32x128xf32>, vector<8x128xf32> -> vector<8x128xf32>
    %7 = arith.addf %3, %6 : vector<8x128xf32>
    %c0_6 = arith.constant 0 : index
    %c0_7 = arith.constant 0 : index
    %8 = vector.load %arg7[%c0_6, %c0_7] : memref<8x128xf32, #tpu.memory_space<vmem>>, vector<8x128xf32>
    tpu.vector_store %arg7[%c0_6, %c0_7], %7 {strides = array<i32>} : memref<8x128xf32, #tpu.memory_space<vmem>>, vector<8x128xf32>,
    %c0_i32_8 = arith.constant 0 : i32
    %9 = arith.cmpi eq, %arg2, %c0_i32_8 : i32
    %10 = arith.extui %9 : i1 to i32
    %c0_i32_9 = arith.constant 0 : i32
    %11 = arith.cmpi ne, %10, %c0_i32_9 : i32
    scf.if %11 {
      %c0_10 = arith.constant 0 : index
      %c0_11 = arith.constant 0 : index
      %12 = vector.load %arg7[%c0_10, %c0_11] : memref<8x128xf32, #tpu.memory_space<vmem>>, vector<8x128xf32>
      %c0_12 = arith.constant 0 : index
      %c0_13 = arith.constant 0 : index
      %13 = vector.load %arg5[%c0_12, %c0_13] : memref<1x128xf32, #tpu.memory_space<vmem>>, vector<1x128xf32>
      %14 = vector.broadcast %13 : vector<1x128xf32> to vector<8x128xf32>
      %15 = arith.addf %12, %14 : vector<8x128xf32>
      %c0_14 = arith.constant 0 : index
      %c0_15 = arith.constant 0 : index
      %16 = vector.load %arg6[%c0_14, %c0_15] : memref<8x128xf32, #tpu.memory_space<vmem>>, vector<8x128xf32>
      tpu.vector_store %arg6[%c0_14, %c0_15], %15 {strides = array<i32>} : memref<8x128xf32, #tpu.memory_space<vmem>>, vector<8x128xf32>,
    } else {
    }
    return
  }
  func.func @transform_0(%arg0: i32, %arg1: i32, %arg2: i32) -> (i32, i32) {
    %c0_i32 = arith.constant 0 : i32
    return %arg0, %arg2 : i32, i32
  }
  func.func @transform_1(%arg0: i32, %arg1: i32, %arg2: i32) -> (i32, i32) {
    %c0_i32 = arith.constant 0 : i32
    return %arg2, %arg1 : i32, i32
  }
  func.func @transform_2(%arg0: i32, %arg1: i32, %arg2: i32) -> (i32, i32) {
    %c0_i32 = arith.constant 0 : i32
    %c0_i32_0 = arith.constant 0 : i32
    return %c0_i32, %arg1 : i32, i32
  }
  func.func @transform_3(%arg0: i32, %arg1: i32, %arg2: i32) -> (i32, i32) {
    %c0_i32 = arith.constant 0 : i32
    return %arg0, %arg1 : i32, i32
  }
}

</mosaic_0001>

<llo_original>
// kernel: tpu_custom_call.1
$region0: #{tpu_custom_call.1}
  #allocation0 [shape = 'u32[]', space=smem, size = 0x4, offset = 0x4, fixed_abs, tag = 'smem constant byte address 0x4 - core index']
  #allocation1 [shape = 'u32[144,128]{1,0:T(1,128)}', space=vmem, size = 0x12000, scoped, tag = 'internal scratch']
  #allocation2 [shape = 'f32[8,128]{1,0:T(8,128)}', space=vmem, size = 0x1000, scoped, tag = 'scratch operand']
  %s0 = inlined_call_operand.hbm [shape: f32[8,32], index: 0, kind: input, shape index: {}]
  %s1 = inlined_call_operand.hbm [shape: f32[32,128], index: 1, kind: input, shape index: {}]
  %s2 = inlined_call_operand.vmem [shape: f32[1,128], index: 2, kind: input, shape index: {}]
  %s3 = inlined_call_operand.hbm [shape: f32[8,128], index: 3, kind: output, shape index: {}]
  %s4 = sld [smem:[#allocation0]]
  $region38: #{tpu_custom_call.1} parent=0
    _
  %s6 = ssub.s32 1, %s4
  %s7 = scalar_select 0, %s6, %s4
  $region1: #{tpu_custom_call.1} parent=0
    #allocation3 [shape = 'u8[4096]{0}', space=vmem, size = 0x1000, scoped, tag = 'input window, operand 0, single buffered']
    #allocation4 [shape = 's32[1]{0}', space=sflag, size = 0x4, scoped, tag = 'scoped memory for tpu_custom_call.1']
    #allocation5 [shape = 's32[1]{0}', space=sflag, size = 0x4, scoped, tag = 'scoped memory for tpu_custom_call.1']
    #allocation6 [shape = 'u8[16384]{0}', space=vmem, size = 0x4000, scoped, tag = 'input window, operand 1, single buffered']
    #allocation7 [shape = 's32[1]{0}', space=sflag, size = 0x4, scoped, tag = 'scoped memory for tpu_custom_call.1']
    #allocation8 [shape = 'u8[4096]{0}', space=vmem, size = 0x1000, scoped, tag = 'output window, operand 0, single buffered']
    %8 = vsyncpa [#allocation4], 0
    %9 = vsyncpa [#allocation7], 0
    %10 = vsyncpa [#allocation5], 0
    // Predicated region
    $region2: #{tpu_custom_call.1} parent=1 // pred_check
      _
    $region3: #{tpu_custom_call.1} parent=1 // pred_check_branch
      %12 = sbr.rel (0) target = $region5
    $region4: #{tpu_custom_call.1} parent=1 // pred_region
      %s14 = ssub.s32 128, 128
      %15 = vsyncadd [#allocation4], %s14
      %s17 = sshll.u32 [#allocation3], 4
      %s18 = int_to_ptr.vmem [resolvable:$true] %s17
      %20 = dma.hbm_to_vmem [thread:$0]  %s0, 128, %s18, [#allocation4]
    $region5: #{tpu_custom_call.1} parent=1 // pred_fallthru
      _
    // Predicated region
    $region6: #{tpu_custom_call.1} parent=1 // pred_check
      _
    $region7: #{tpu_custom_call.1} parent=1 // pred_check_branch
      %22 = sbr.rel (0) target = $region9
    $region8: #{tpu_custom_call.1} parent=1 // pred_region
      %s24 = ssub.s32 512, 512
      %25 = vsyncadd [#allocation7], %s24
      %s26 = sshll.u32 [#allocation6], 4
      %s27 = int_to_ptr.vmem [resolvable:$true] %s26
      %32 = dma.hbm_to_vmem [thread:$0]  %s1, 512, %s27, [#allocation7], 128, 128, 8
    $region9: #{tpu_custom_call.1} parent=1 // pred_fallthru
      _
    // Predicated region
    $region10: #{tpu_custom_call.1} parent=1 // pred_check
      _
    $region11: #{tpu_custom_call.1} parent=1 // pred_check_branch
      %34 = sbr.rel (0) target = $region13
    $region12: #{tpu_custom_call.1} parent=1 // pred_region
      _
    $region13: #{tpu_custom_call.1} parent=1 // pred_fallthru
      _
    // Predicated region
    $region14: #{tpu_custom_call.1} parent=1 // pred_check
      _
    $region15: #{tpu_custom_call.1} parent=1 // pred_check_branch
      %36 = sbr.rel (0) target = $region17
    $region16: #{tpu_custom_call.1} parent=1 // pred_region
      %37 = dma.done [#allocation4], 128
    $region17: #{tpu_custom_call.1} parent=1 // pred_fallthru
      _
    // Predicated region
    $region18: #{tpu_custom_call.1} parent=1 // pred_check
      _
    $region19: #{tpu_custom_call.1} parent=1 // pred_check_branch
      %39 = sbr.rel (0) target = $region21
    $region20: #{tpu_custom_call.1} parent=1 // pred_region
      %40 = dma.done [#allocation7], 512
    $region21: #{tpu_custom_call.1} parent=1 // pred_fallthru
      _
    %p41 = scmp.eq.s32.totalorder 0, 0
    // Predicated region
    $region22: #{tpu_custom_call.1} parent=1 // pred_check
      %p42 = pneg %p41
    $region23: #{tpu_custom_call.1} parent=1 // pred_check_branch
      %44 = sbr.rel (%p42) target = $region25
    $region24: #{tpu_custom_call.1} parent=1 // pred_region
      %45 = vst [vmem:[#allocation2] sm:$0xff] 0.0
    $region25: #{tpu_custom_call.1} parent=1 // pred_fallthru
      _
    %v46 = vld [vmem:[#allocation2] sm:$0xff]
    %v47 = vld [vmem:[#allocation3] sm:$0xff]
    %v48 = vld [vmem:[#allocation6] sm:$0xff]
    %v49 = vld [vmem:[#allocation6 + $0x8] sm:$0xff]
    %v50 = vld [vmem:[#allocation6 + $0x10] sm:$0xff]
    %v51 = vld [vmem:[#allocation6 + $0x18] sm:$0xff]
    %vm52 = vcmask 261120
    %v54 = vsel %vm52, %v47, 0
    %56 = vmatprep.subr.mxu0 0.0
    %57 = vmatpush1.msra.mxu0 %v48
    %58 = vmatprep.subr.mxu0 0.0
    %59 = vmatpush1.msra.mxu0 %v49
    %60 = vmatprep.subr.mxu0 0.0
    %61 = vmatpush1.msra.mxu0 %v50
    %62 = vmatprep.subr.mxu0 0.0
    %63 = vmatpush1.msra.mxu0 %v51
    %64 = vmatprep.subr.mxu0 0.0
    %65 = vmatpush1.msra.mxu0 0.0
    %66 = vmatprep.subr.mxu0 0.0
    %67 = vmatpush1.msra.mxu0 0.0
    %68 = vmatprep.subr.mxu0 0.0
    %69 = vmatpush1.msra.mxu0 0.0
    %70 = vmatprep.subr.mxu0 0.0
    %71 = vmatpush1.msra.mxu0 0.0
    %72 = vmatprep.subr.mxu0 0.0
    %73 = vmatpush1.msra.mxu0 0.0
    %74 = vmatprep.subr.mxu0 0.0
    %75 = vmatpush1.msra.mxu0 0.0
    %76 = vmatprep.subr.mxu0 0.0
    %77 = vmatpush1.msra.mxu0 0.0
    %78 = vmatprep.subr.mxu0 0.0
    %79 = vmatpush1.msra.mxu0 0.0
    %80 = vmatprep.subr.mxu0 0.0
    %81 = vmatpush1.msra.mxu0 0.0
    %82 = vmatprep.subr.mxu0 0.0
    %83 = vmatpush1.msra.mxu0 0.0
    %84 = vmatprep.subr.mxu0 0.0
    %85 = vmatpush1.msra.mxu0 0.0
    %86 = vmatprep.subr.mxu0 0.0
    %87 = vmatpush1.msra.mxu0 0.0
    %88 = vmatprep.subr.mxu0 0.0
    %89 = vmatpush1.msra.mxu0 0.0
    %90 = vmatprep.subr.mxu0 0.0
    %91 = vmatpush1.msra.mxu0 0.0
    %92 = vmatprep.subr.mxu0 0.0
    %93 = vmatpush1.msra.mxu0 0.0
    %94 = vmatprep.subr.mxu0 0.0
    %95 = vmatpush1.msra.mxu0 0.0
    %96 = vmatprep.subr.mxu0 0.0
    %97 = vmatpush1.msra.mxu0 0.0
    %98 = vmatprep.subr.mxu0 0.0
    %99 = vmatpush1.msra.mxu0 0.0
    %100 = vmatprep.subr.mxu0 0.0
    %101 = vmatpush1.msra.mxu0 0.0
    %102 = vmatprep.subr.mxu0 0.0
    %103 = vmatpush1.msra.mxu0 0.0
    %104 = vmatprep.subr.mxu0 0.0
    %105 = vmatpush1.msra.mxu0 0.0
    %106 = vmatprep.subr.mxu0 0.0
    %107 = vmatpush1.msra.mxu0 0.0
    %108 = vmatprep.subr.mxu0 0.0
    %109 = vmatpush1.msra.mxu0 0.0
    %110 = vmatprep.subr.mxu0 0.0
    %111 = vmatpush1.msra.mxu0 0.0
    %112 = vmatprep.subr.mxu0 0.0
    %113 = vmatpush1.msra.mxu0 0.0
    %114 = vmatprep.subr.mxu0 0.0
    %115 = vmatpush1.msra.mxu0 0.0
    %116 = vmatprep.subr.mxu0 0.0
    %117 = vmatpush1.msra.mxu0 0.0
    %118 = vmatprep.subr.mxu0 0.0
    %119 = vmatpush1.msra.mxu0 0.0
    %120 = vmatprep.mubr.f32.mxu0 0.0
    %121 = vmatmul.mubr.f32.gmra.mrb[0].mxu0 %v54
    %v122 = vpop.f32.mrb[0].mxu0
    %v123 = vadd.f32 0.0, %v122
    %v124 = vpop.f32.mrb[0].mxu0
    %125 = vdwg.mxu0
    %v126 = vadd.f32 %v46, %v123
    %127 = vst [vmem:[#allocation2] sm:$0xff] %v126
    // Predicated region
    $region26: #{tpu_custom_call.1} parent=1 // pred_check
      %p128 = pneg %p41
    $region27: #{tpu_custom_call.1} parent=1 // pred_check_branch
      %130 = sbr.rel (%p128) target = $region29
    $region28: #{tpu_custom_call.1} parent=1 // pred_region
      %v131 = vld [vmem:[#allocation2] sm:$0xff]
      %v132 = vld [vmem:[%s2] sm:$0x1]
      %v134 = vlaneseq
      %v135 = vshrl.u32 %v134, 7
      %v136 = vsub.s32 0, %v135
      %v137 = vrot.slane %v132, %v136
      %v139 = vadd.f32 %v131, %v137
      %140 = vst [vmem:[#allocation8] sm:$0xff] %v139
    $region29: #{tpu_custom_call.1} parent=1 // pred_fallthru
      _
    // Predicated region
    $region30: #{tpu_custom_call.1} parent=1 // pred_check
      _
    $region31: #{tpu_custom_call.1} parent=1 // pred_check_branch
      %142 = sbr.rel (0) target = $region33
    $region32: #{tpu_custom_call.1} parent=1 // pred_region
      %s144 = ssub.s32 128, 128
      %145 = vsyncadd [#allocation5], %s144
      %s147 = sshll.u32 [#allocation8], 4
      %s148 = int_to_ptr.vmem [resolvable:$true] %s147
      %150 = dma.vmem_to_hbm [thread:$0]  %s148, 128, %s3, [#allocation5]
    $region33: #{tpu_custom_call.1} parent=1 // pred_fallthru
      _
    // Predicated region
    $region34: #{tpu_custom_call.1} parent=1 // pred_check
      _
    $region35: #{tpu_custom_call.1} parent=1 // pred_check_branch
      %152 = sbr.rel (0) target = $region37
    $region36: #{tpu_custom_call.1} parent=1 // pred_region
      %153 = dma.done [#allocation5], 128
    $region37: #{tpu_custom_call.1} parent=1 // pred_fallthru
      _
    %154 = vsyncpa [#allocation4], 1
    %155 = vsyncpa [#allocation7], 1
    %156 = vsyncpa [#allocation5], 1

</llo_original>
